<compile_context>
chip_gen: v6e
topology: v6e:2x2x1
jax: 0.10.0
libtpu: 0.0.40
codegen_flags: <defaults>
</compile_context>

<pallas_src>
import functools

import jax
import jax.numpy as jnp
from jax import lax
from jax.experimental import pallas as pl
from jax.experimental.pallas import tpu as pltpu

_LANES = 128
_SUBLANES = 8
_TILE = _SUBLANES * _LANES            # one f32 vreg = 1024 elements
_MAX_BLOCK_ROWS = 4096                # 4096*128*4B = 2 MiB per input per buffer
_VMEM_LIMIT_BYTES = 32 * 1024 * 1024  # 2 inputs x 2 buffers x 2 MiB + temps, all gens


def _disc_loss_kernel(block_rows, blocks_per_core, total_blocks, rows, need_mask,
                      fake_ref, real_ref, out_ref, acc_ref):
    """Per-block BCE partial sums with PyTorch semantics (log clamped at -100)."""
    c = pl.program_id(0)          # core chunk ("parallel")
    i = pl.program_id(1)          # block within this core's chunk ("arbitrary")
    last = pl.num_programs(1) - 1

    @pl.when(i == 0)
    def _init():
        acc_ref[...] = jnp.zeros_like(acc_ref)

    # DMA in native dtype (bf16 inputs stay bf16 across the call boundary);
    # upcast to f32 only in VMEM for the log/accumulate chain.
    fake = fake_ref[...].astype(jnp.float32)
    real = real_ref[...].astype(jnp.float32)

    # PyTorch BCELoss: clamp log at -100.  1 - x is exact for x >= 0.5 (Sterbenz)
    # and the clamp bounds the error elsewhere.  Kept as two logs (not
    # log(real * (1 - fake))) to preserve exact clamp semantics for saturated
    # probabilities.
    term = (jnp.maximum(jnp.log(real), -100.0) +
            jnp.maximum(jnp.log(1.0 - fake), -100.0))

    def _fold(t):
        # (block_rows, 128) -> (8, 128): pure vreg-wise adds, no XLU per step.
        acc_ref[...] += t.reshape(block_rows // _SUBLANES, _SUBLANES,
                                  _LANES).sum(axis=0)

    if need_mask:  # static: only compiled in when a ragged tail can exist
        g = c * blocks_per_core + i            # global block index
        limit = rows - g * block_rows          # valid rows in this block
        is_full = limit >= block_rows

        @pl.when(is_full)
        def _full():
            _fold(term)                        # full blocks: no mask cost

        @pl.when(jnp.logical_not(is_full))
        def _tail():
            # OOB rows hold garbage (log may be NaN) -> jnp.where, never t*mask.
            row_idx = lax.broadcasted_iota(jnp.int32, term.shape, 0)
            _fold(jnp.where(row_idx < limit, term, 0.0))
    else:
        _fold(term)

    @pl.when(i == last)
    def _finalize():
        out_ref[0, 0] = jnp.sum(acc_ref[...])   # per-core partial sum


def discriminator_loss(discriminated_fake, discriminated_real):
    """JAX/Pallas equivalent of DiscriminatorLoss.forward. Returns a scalar."""
    assert discriminated_fake.shape == discriminated_real.shape
    n = discriminated_fake.size

    fake_flat = discriminated_fake.reshape(-1)
    real_flat = discriminated_real.reshape(-1)

    # Round the flat length up to one (8,128) vreg tile so the arrays reshape to
    # a lane-dense (rows, 128) slab with rows % 8 == 0.  When numel % 1024 == 0
    # (the common case) this is a free bitcast.  Pad values contribute exactly
    # zero loss: real pad = 1 (log 1 = 0), fake pad = 0 (log(1-0) = 0).
    padded_n = pl.cdiv(n, _TILE) * _TILE
    if padded_n != n:
        # TODO(synk): unaligned sizes pay one extra HBM copy here; could be
        # removed by masking the ragged lane tail inside the kernel instead.
        fake_flat = jnp.pad(fake_flat, (0, padded_n - n), constant_values=0)
        real_flat = jnp.pad(real_flat, (0, padded_n - n), constant_values=1)

    rows = padded_n // _LANES
    fake2d = fake_flat.reshape(rows, _LANES)
    real2d = real_flat.reshape(rows, _LANES)

    block_rows = min(rows, _MAX_BLOCK_ROWS)
    total_blocks = pl.cdiv(rows, block_rows)

    # Split blocks across TensorCores: "parallel" leading axis -> 2x bandwidth on
    # v7x megacore; plain sequential (and harmless) on v5e/v6e single-TC chips.
    num_cores = 2 if total_blocks >= 2 else 1
    blocks_per_core = pl.cdiv(total_blocks, num_cores)

    need_mask = (rows % block_rows != 0) or (num_cores * blocks_per_core != total_blocks)

    kernel = functools.partial(_disc_loss_kernel, block_rows, blocks_per_core,
                               total_blocks, rows, need_mask)

    def _in_map(c, i):
        # Clamp so the DMA never reads past the array; the kernel masks the
        # (at most one) re-read block so it contributes zero.
        return (jnp.minimum(c * blocks_per_core + i, total_blocks - 1), 0)

    in_bytes = (fake2d.size * fake2d.dtype.itemsize +
                real2d.size * real2d.dtype.itemsize)
    cost = pl.CostEstimate(flops=6 * padded_n,
                           transcendentals=2 * padded_n,
                           bytes_accessed=in_bytes + 4 * num_cores)

    partials = pl.pallas_call(
        kernel,
        out_shape=jax.ShapeDtypeStruct((num_cores, 1), jnp.float32),
        grid=(num_cores, blocks_per_core),
        in_specs=[
            pl.BlockSpec((block_rows, _LANES), _in_map),
            pl.BlockSpec((block_rows, _LANES), _in_map),
        ],
        out_specs=pl.BlockSpec((1, 1), lambda c, i: (c, 0),
                               memory_space=pltpu.SMEM),
        scratch_shapes=[pltpu.VMEM((_SUBLANES, _LANES), jnp.float32)],
        compiler_params=pltpu.CompilerParams(
            dimension_semantics=("parallel", "arbitrary"),
            vmem_limit_bytes=_VMEM_LIMIT_BYTES),
        cost_estimate=cost,
    )(fake2d, real2d)

    # TODO(synk): for tiny patch-GAN maps (grid == (1,1)) an XLA fusion would be
    # cheaper than a Pallas launch; kept on the kernel path so it is exercised.
    # mean(BCE_real) + mean(BCE_fake) == -(sum of per-core partials) / n.
    return -jnp.sum(partials) * (1.0 / n)


def _reference(fake, real):
    # Pure-JAX reference mirroring torch.nn.BCELoss (mean reduction, clamp -100).
    real_loss = jnp.mean(-jnp.maximum(jnp.log(real), -100.0))
    fake_loss = jnp.mean(-jnp.maximum(jnp.log(1.0 - fake), -100.0))
    return real_loss + fake_loss


if __name__ == "__main__":
    key = jax.random.PRNGKey(0)
    k_fake, k_real = jax.random.split(key)

    # Discriminator outputs: probabilities in (0, 1), e.g. NCHW patch-GAN maps.
    shape = (2, 4, 16, 16)
    discriminated_fake = jax.random.uniform(k_fake, shape, jnp.float32,
                                            minval=1e-3, maxval=1.0 - 1e-3)
    discriminated_real = jax.random.uniform(k_real, shape, jnp.float32,
                                            minval=1e-3, maxval=1.0 - 1e-3)

    loss = discriminator_loss(discriminated_fake, discriminated_real)
    loss = jax.block_until_ready(loss)

    ref = _reference(discriminated_fake, discriminated_real)
    assert jnp.allclose(loss, ref, rtol=1e-5, atol=1e-5), (loss, ref)

    print("KERNEL_OK")
</pallas_src>

<mosaic_0001>
module attributes {stable_mosaic.version = 11 : i64} {
  func.func @_disc_loss_kernel(%arg0: i32, %arg1: i32, %arg2: memref<16x128xf32, #tpu.memory_space<vmem>>, %arg3: memref<16x128xf32, #tpu.memory_space<vmem>>, %arg4: memref<1x1xf32, #tpu.memory_space<smem>>, %arg5: memref<8x128xf32, #tpu.memory_space<vmem>>) attributes {dimension_semantics = [#tpu.dimension_semantics<parallel>, #tpu.dimension_semantics<arbitrary>], iteration_bounds = array<i64: 1, 1>, scalar_prefetch = 0 : i64, scratch_operands = 1 : i64, tpu.core_type = #tpu.core_type<tc>, window_params = [{transform_indices = @transform_0, window_bounds = array<i64: 16, 128>}, {transform_indices = @transform_1, window_bounds = array<i64: 16, 128>}, {transform_indices = @transform_2, window_bounds = array<i64: 1, 1>}]} {
    %c0_i32 = arith.constant 0 : i32
    %0 = arith.cmpi eq, %arg1, %c0_i32 : i32
    %1 = arith.extui %0 : i1 to i32
    %c0_i32_0 = arith.constant 0 : i32
    %2 = arith.cmpi ne, %1, %c0_i32_0 : i32
    scf.if %2 {
      %cst_13 = arith.constant 0.000000e+00 : f32
      %22 = vector.broadcast %cst_13 : f32 to vector<8x128xf32>
      %c0_14 = arith.constant 0 : index
      %c0_15 = arith.constant 0 : index
      %23 = vector.load %arg5[%c0_14, %c0_15] : memref<8x128xf32, #tpu.memory_space<vmem>>, vector<8x128xf32>
      tpu.vector_store %arg5[%c0_14, %c0_15], %22 {strides = array<i32>} : memref<8x128xf32, #tpu.memory_space<vmem>>, vector<8x128xf32>,
    } else {
    }
    %c0 = arith.constant 0 : index
    %c0_1 = arith.constant 0 : index
    %3 = vector.load %arg2[%c0, %c0_1] : memref<16x128xf32, #tpu.memory_space<vmem>>, vector<16x128xf32>
    %c0_2 = arith.constant 0 : index
    %c0_3 = arith.constant 0 : index
    %4 = vector.load %arg3[%c0_2, %c0_3] : memref<16x128xf32, #tpu.memory_space<vmem>>, vector<16x128xf32>
    %5 = math.log %4 : vector<16x128xf32>
    %cst = arith.constant -1.000000e+02 : f32
    %6 = vector.broadcast %cst : f32 to vector<16x128xf32>
    %7 = arith.maximumf %5, %6 : vector<16x128xf32>
    %cst_4 = arith.constant 1.000000e+00 : f32
    %8 = vector.broadcast %cst_4 : f32 to vector<16x128xf32>
    %9 = arith.subf %8, %3 : vector<16x128xf32>
    %10 = math.log %9 : vector<16x128xf32>
    %cst_5 = arith.constant -1.000000e+02 : f32
    %11 = vector.broadcast %cst_5 : f32 to vector<16x128xf32>
    %12 = arith.maximumf %10, %11 : vector<16x128xf32>
    %13 = arith.addf %7, %12 : vector<16x128xf32>
    %c0_6 = arith.constant 0 : index
    %c0_7 = arith.constant 0 : index
    %14 = vector.load %arg5[%c0_6, %c0_7] : memref<8x128xf32, #tpu.memory_space<vmem>>, vector<8x128xf32>
    %15 = vector.shape_cast %13 : vector<16x128xf32> to vector<2x8x128xf32>
    %cst_8 = arith.constant dense<0.000000e+00> : vector<8x128xf32>
    %16 = vector.multi_reduction <add>, %15, %cst_8 [0] : vector<2x8x128xf32> to vector<8x128xf32>
    %17 = arith.addf %14, %16 : vector<8x128xf32>
    %c0_9 = arith.constant 0 : index
    %c0_10 = arith.constant 0 : index
    %18 = vector.load %arg5[%c0_9, %c0_10] : memref<8x128xf32, #tpu.memory_space<vmem>>, vector<8x128xf32>
    tpu.vector_store %arg5[%c0_9, %c0_10], %17 {strides = array<i32>} : memref<8x128xf32, #tpu.memory_space<vmem>>, vector<8x128xf32>,
    %c0_i32_11 = arith.constant 0 : i32
    %19 = arith.cmpi eq, %arg1, %c0_i32_11 : i32
    %20 = arith.extui %19 : i1 to i32
    %c0_i32_12 = arith.constant 0 : i32
    %21 = arith.cmpi ne, %20, %c0_i32_12 : i32
    scf.if %21 {
      %c0_13 = arith.constant 0 : index
      %c0_14 = arith.constant 0 : index
      %22 = vector.load %arg5[%c0_13, %c0_14] : memref<8x128xf32, #tpu.memory_space<vmem>>, vector<8x128xf32>
      %23 = vector.shape_cast %22 : vector<8x128xf32> to vector<1x8x128xf32>
      %cst_15 = arith.constant dense<0.000000e+00> : vector<1xf32>
      %24 = vector.multi_reduction <add>, %23, %cst_15 [1, 2] : vector<1x8x128xf32> to vector<1xf32>
      %25 = vector.shape_cast %24 : vector<1xf32> to vector<1x1x1xf32>
      %26 = vector.extract %25[0, 0, 0] : f32 from vector<1x1x1xf32>
      %c0_16 = arith.constant 0 : index
      %c0_17 = arith.constant 0 : index
      %27 = memref.load %arg4[%c0_16, %c0_17] : memref<1x1xf32, #tpu.memory_space<smem>>
      memref.store %26, %arg4[%c0_16, %c0_17] : memref<1x1xf32, #tpu.memory_space<smem>>
    } else {
    }
    return
  }
  func.func @transform_0(%arg0: i32, %arg1: i32) -> (i32, i32) {
    %c1_i32 = arith.constant 1 : i32
    %0 = arith.muli %arg0, %c1_i32 : i32
    %1 = arith.addi %0, %arg1 : i32
    %c0_i32 = arith.constant 0 : i32
    %2 = arith.minsi %1, %c0_i32 : i32
    %c0_i32_0 = arith.constant 0 : i32
    %c0_i32_1 = arith.constant 0 : i32
    return %2, %c0_i32_0 : i32, i32
  }
  func.func @transform_1(%arg0: i32, %arg1: i32) -> (i32, i32) {
    %c1_i32 = arith.constant 1 : i32
    %0 = arith.muli %arg0, %c1_i32 : i32
    %1 = arith.addi %0, %arg1 : i32
    %c0_i32 = arith.constant 0 : i32
    %2 = arith.minsi %1, %c0_i32 : i32
    %c0_i32_0 = arith.constant 0 : i32
    %c0_i32_1 = arith.constant 0 : i32
    return %2, %c0_i32_0 : i32, i32
  }
  func.func @transform_2(%arg0: i32, %arg1: i32) -> (i32, i32) {
    %c0_i32 = arith.constant 0 : i32
    %c0_i32_0 = arith.constant 0 : i32
    return %arg0, %c0_i32 : i32, i32
  }
}

</mosaic_0001>

<llo_original>
// kernel: tpu_custom_call.1
$region0: #{tpu_custom_call.1}
  #allocation0 [shape = 'u32[]', space=smem, size = 0x4, offset = 0x4, fixed_abs, tag = 'smem constant byte address 0x4 - core index']
  #allocation1 [shape = 'u32[144,128]{1,0:T(1,128)}', space=vmem, size = 0x12000, scoped, tag = 'internal scratch']
  #allocation2 [shape = 'f32[8,128]{1,0:T(8,128)}', space=vmem, size = 0x1000, scoped, tag = 'scratch operand']
  %s0 = inlined_call_operand.hbm [shape: f32[16,128], index: 0, kind: input, shape index: {}]
  %s1 = inlined_call_operand.hbm [shape: f32[16,128], index: 1, kind: input, shape index: {}]
  %s2 = inlined_call_operand.hbm [shape: f32[1,1], index: 2, kind: output, shape index: {}]
  %s3 = sld [smem:[#allocation0]]
  $region34: #{tpu_custom_call.1} parent=0
    _
  %s5 = ssub.s32 1, %s3
  %s6 = scalar_select 0, %s5, %s3
  $region1: #{tpu_custom_call.1} parent=0
    #allocation3 [shape = 'u8[8192]{0}', space=vmem, size = 0x2000, scoped, tag = 'input window, operand 0, single buffered']
    #allocation4 [shape = 's32[1]{0}', space=sflag, size = 0x4, scoped, tag = 'scoped memory for tpu_custom_call.1']
    #allocation5 [shape = 's32[1]{0}', space=sflag, size = 0x4, scoped, tag = 'scoped memory for tpu_custom_call.1']
    #allocation6 [shape = 'u8[8192]{0}', space=vmem, size = 0x2000, scoped, tag = 'input window, operand 1, single buffered']
    #allocation7 [shape = 's32[1]{0}', space=sflag, size = 0x4, scoped, tag = 'scoped memory for tpu_custom_call.1']
    #allocation8 [shape = 'u8[512]{0}', space=smem, size = 0x200, scoped, tag = 'output window, operand 0, single buffered']
    %7 = vsyncpa [#allocation4], 0
    %8 = vsyncpa [#allocation7], 0
    %9 = vsyncpa [#allocation5], 0
    // Predicated region
    $region2: #{tpu_custom_call.1} parent=1 // pred_check
      _
    $region3: #{tpu_custom_call.1} parent=1 // pred_check_branch
      %11 = sbr.rel (0) target = $region5
    $region4: #{tpu_custom_call.1} parent=1 // pred_region
      %s12 = sadd.s32 0, 0
      %p13 = scmp.lt.s32.totalorder %s12, 0
      %s14 = scalar_select %p13, %s12, 0
      %s15 = smul.u32 2, %s14
      %s17 = ssub.s32 256, 256
      %18 = vsyncadd [#allocation4], %s17
      %s19 = smul.addr %s15, 128
      %s20 = scalar_lea.hbm %s0, %s19
      %s21 = sshll.u32 [#allocation3], 4
      %s22 = int_to_ptr.vmem [resolvable:$true] %s21
      %27 = dma.hbm_to_vmem [thread:$0]  %s20, 256, %s22, [#allocation4], 128, 128, 8
    $region5: #{tpu_custom_call.1} parent=1 // pred_fallthru
      _
    // Predicated region
    $region6: #{tpu_custom_call.1} parent=1 // pred_check
      _
    $region7: #{tpu_custom_call.1} parent=1 // pred_check_branch
      %29 = sbr.rel (0) target = $region9
    $region8: #{tpu_custom_call.1} parent=1 // pred_region
      %s30 = sadd.s32 0, 0
      %p31 = scmp.lt.s32.totalorder %s30, 0
      %s32 = scalar_select %p31, %s30, 0
      %s33 = smul.u32 2, %s32
      %s35 = ssub.s32 256, 256
      %36 = vsyncadd [#allocation7], %s35
      %s37 = smul.addr %s33, 128
      %s38 = scalar_lea.hbm %s1, %s37
      %s39 = sshll.u32 [#allocation6], 4
      %s40 = int_to_ptr.vmem [resolvable:$true] %s39
      %45 = dma.hbm_to_vmem [thread:$0]  %s38, 256, %s40, [#allocation7], 128, 128, 8
    $region9: #{tpu_custom_call.1} parent=1 // pred_fallthru
      _
    // Predicated region
    $region10: #{tpu_custom_call.1} parent=1 // pred_check
      _
    $region11: #{tpu_custom_call.1} parent=1 // pred_check_branch
      %47 = sbr.rel (0) target = $region13
    $region12: #{tpu_custom_call.1} parent=1 // pred_region
      %48 = dma.done [#allocation4], 256
    $region13: #{tpu_custom_call.1} parent=1 // pred_fallthru
      _
    // Predicated region
    $region14: #{tpu_custom_call.1} parent=1 // pred_check
      _
    $region15: #{tpu_custom_call.1} parent=1 // pred_check_branch
      %50 = sbr.rel (0) target = $region17
    $region16: #{tpu_custom_call.1} parent=1 // pred_region
      %51 = dma.done [#allocation7], 256
    $region17: #{tpu_custom_call.1} parent=1 // pred_fallthru
      _
    %s52 = sadd.s32 0, 0
    %p53 = scmp.lt.s32.totalorder %s52, 0
    %s54 = scalar_select %p53, %s52, 0
    %s55 = smul.u32 2, %s54
    %s56 = sadd.s32 0, 0
    %p57 = scmp.lt.s32.totalorder %s56, 0
    %s58 = scalar_select %p57, %s56, 0
    %s59 = smul.u32 2, %s58
    %p60 = scmp.eq.s32.totalorder 0, 0
    // Predicated region
    $region18: #{tpu_custom_call.1} parent=1 // pred_check
      %p61 = pneg %p60
    $region19: #{tpu_custom_call.1} parent=1 // pred_check_branch
      %63 = sbr.rel (%p61) target = $region21
    $region20: #{tpu_custom_call.1} parent=1 // pred_region
      %64 = vst [vmem:[#allocation2] sm:$0xff] 0.0
    $region21: #{tpu_custom_call.1} parent=1 // pred_fallthru
      _
    %v65 = vld [vmem:[#allocation3] sm:$0xff]
    %v66 = vld [vmem:[#allocation3 + $0x8] sm:$0xff]
    %v67 = vld [vmem:[#allocation6] sm:$0xff]
    %v68 = vld [vmem:[#allocation6 + $0x8] sm:$0xff]
    %v69 = vlog2.pop %v67
    %v70 = vmul.f32 %v69, 0.6931472
    %v71 = vlog2.pop %v68
    %v72 = vmul.f32 %v71, 0.6931472
    %v73 = vmax.f32 %v70, -100.0
    %v74 = vmax.f32 %v72, -100.0
    %v75 = vsub.f32 1.0, %v65
    %v76 = vsub.f32 1.0, %v66
    %v77 = vlog2.pop %v75
    %v78 = vmul.f32 %v77, 0.6931472
    %v79 = vlog2.pop %v76
    %v80 = vmul.f32 %v79, 0.6931472
    %v81 = vmax.f32 %v78, -100.0
    %v82 = vmax.f32 %v80, -100.0
    %v83 = vadd.f32 %v73, %v81
    %v84 = vadd.f32 %v74, %v82
    %v85 = vld [vmem:[#allocation2] sm:$0xff]
    %v86 = vadd.f32 %v83, %v84
    %v87 = vadd.f32 %v85, %v86
    %88 = vst [vmem:[#allocation2] sm:$0xff] %v87
    // Predicated region
    $region22: #{tpu_custom_call.1} parent=1 // pred_check
      %p89 = pneg %p60
    $region23: #{tpu_custom_call.1} parent=1 // pred_check_branch
      %91 = sbr.rel (%p89) target = $region25
    $region24: #{tpu_custom_call.1} parent=1 // pred_region
      %v92 = vld [vmem:[#allocation2] sm:$0xff]
      %93 = vadd.xlane.f32.xlu0 %v92
      %v94 = vpop.xlane.xlu0 %93
      %v95 = vrot.slane %v94, 4
      %v96 = vadd.f32 %v94, %v95
      %v97 = vrot.slane %v96, 2
      %v98 = vadd.f32 %v96, %v97
      %v99 = vrot.slane %v98, 1
      %v100 = vadd.f32 %v98, %v99
      %s101 = vtos %v100
      %s102 = scalar_lea.smem [#allocation8], 0
      %103 = sst [smem:[%s102]] %s101
    $region25: #{tpu_custom_call.1} parent=1 // pred_fallthru
      _
    // Predicated region
    $region26: #{tpu_custom_call.1} parent=1 // pred_check
      _
    $region27: #{tpu_custom_call.1} parent=1 // pred_check_branch
      %105 = sbr.rel (0) target = $region29
    $region28: #{tpu_custom_call.1} parent=1 // pred_region
      %s107 = ssub.s32 16, 16
      %108 = vsyncadd [#allocation5], %s107
      %111 = dma.smem_to_hbm [#allocation8], 16, %s2, [#allocation5]
    $region29: #{tpu_custom_call.1} parent=1 // pred_fallthru
      _
    // Predicated region
    $region30: #{tpu_custom_call.1} parent=1 // pred_check
      _
    $region31: #{tpu_custom_call.1} parent=1 // pred_check_branch
      %113 = sbr.rel (0) target = $region33
    $region32: #{tpu_custom_call.1} parent=1 // pred_region
      %114 = dma.done [#allocation5], 16
    $region33: #{tpu_custom_call.1} parent=1 // pred_fallthru
      _
    %115 = sfence
    %116 = vsyncpa [#allocation4], 1
    %117 = vsyncpa [#allocation7], 1
    %118 = vsyncpa [#allocation5], 1

</llo_original>
